<compile_context>
chip_gen: v6e
topology: v6e:2x2x1
jax: 0.10.0
libtpu: 0.0.40
codegen_flags: <defaults>
</compile_context>

<pallas_src>
from functools import partial

import jax
import jax.numpy as jnp
from jax import lax
from jax.experimental import pallas as pl
from jax.experimental.pallas import tpu as pltpu

_EPS = 1e-12            # matches F.normalize default eps
_LANES = 128            # lane width
_SUB = 16               # sublane rows per in-kernel compute chunk (2 vregs / value)
_TR_MAX = 512           # max sublane-rows per grid block -> 65536 lanes/block
                        # (6+9) * 512 * 128 * 4 B ~= 3.75 MiB/step, ~7.5 MiB
                        # double-buffered: safe under v5e's 16 MiB scoped default.
_MIN_STEPS = 4          # aim for >=4 grid steps (pipelining + v7x 2-TC split)
_SMALL_N = 4096         # below this, plain XLA fusion beats pallas_call overhead


def _round_up(a, b):
    return ((a + b - 1) // b) * b


def _rot6d_kernel(x_ref, o_ref):
    # x_ref: (6, TR, 128) f32, o_ref: (9, TR, 128) f32.
    # Walk the block in 16-row sub-chunks: each intermediate is 2 vregs, so
    # ~12-16 live values stay comfortably inside the 64-vreg file (no spills),
    # while the HBM DMA still moves the full TR-row block per grid step.
    tr = x_ref.shape[1]
    nsub = tr // _SUB

    def body(s, carry):
        r0 = pl.multiple_of(s * _SUB, _SUB)
        sl = pl.ds(r0, _SUB)

        a1x = x_ref[0, sl, :]; a1y = x_ref[1, sl, :]; a1z = x_ref[2, sl, :]
        a2x = x_ref[3, sl, :]; a2y = x_ref[4, sl, :]; a2z = x_ref[5, sl, :]

        # b1 = normalize(a1): a1 * rsqrt(max(|a1|^2, eps^2)) == a1 / max(|a1|, eps)
        ss1 = a1x * a1x + a1y * a1y + a1z * a1z
        inv1 = lax.rsqrt(jnp.maximum(ss1, _EPS * _EPS))
        b1x = a1x * inv1; b1y = a1y * inv1; b1z = a1z * inv1

        # dot = <b1, a2>
        dot = b1x * a2x + b1y * a2y + b1z * a2z

        # b2 = normalize(a2 - dot * b1)
        u2x = a2x - dot * b1x
        u2y = a2y - dot * b1y
        u2z = a2z - dot * b1z
        ss2 = u2x * u2x + u2y * u2y + u2z * u2z
        inv2 = lax.rsqrt(jnp.maximum(ss2, _EPS * _EPS))
        b2x = u2x * inv2; b2y = u2y * inv2; b2z = u2z * inv2

        # b3 = b1 x b2
        b3x = b1y * b2z - b1z * b2y
        b3y = b1z * b2x - b1x * b2z
        b3z = b1x * b2y - b1y * b2x

        o_ref[0, sl, :] = b1x; o_ref[1, sl, :] = b1y; o_ref[2, sl, :] = b1z
        o_ref[3, sl, :] = b2x; o_ref[4, sl, :] = b2y; o_ref[5, sl, :] = b2z
        o_ref[6, sl, :] = b3x; o_ref[7, sl, :] = b3y; o_ref[8, sl, :] = b3z
        return carry

    lax.fori_loop(0, nsub, body, 0, unroll=min(4, nsub))


def _decode_ref(x):
    """Pure-jnp reference / small-N fast path. x: (N, 3, 2) f32 -> (N, 3, 3)."""
    a1, a2 = x[:, :, 0], x[:, :, 1]
    b1 = a1 / jnp.maximum(jnp.linalg.norm(a1, axis=1, keepdims=True), _EPS)
    dot = jnp.sum(b1 * a2, axis=1, keepdims=True)
    u2 = a2 - dot * b1
    b2 = u2 / jnp.maximum(jnp.linalg.norm(u2, axis=1, keepdims=True), _EPS)
    b3 = jnp.cross(b1, b2, axis=1)
    return jnp.stack([b1, b2, b3], axis=-1)


@partial(jax.jit, static_argnames=("force_pallas",))
def continuous_rot_repr_decode(module_input, *, force_pallas=False):
    """JAX/Pallas equivalent of ContinousRotReprDecoder.forward.

    module_input: any shape whose total size is divisible by 6.
    returns: (N, 3, 3) float32 array, N = module_input.size // 6.
    The whole wrapper is jitted so the AoS<->SoA layout plumbing (pad,
    transpose, slice) fuses into single copies on each side of the kernel.
    For best end-to-end performance keep the SoA (6,N)/(9,N) plane layout
    across the op boundary in the surrounding model code.
    """
    x = jnp.asarray(module_input, jnp.float32).reshape(-1, 3, 2)   # (N, 3, 2)
    n = x.shape[0]
    if n == 0:
        return jnp.zeros((0, 3, 3), jnp.float32)

    # Tiny batches: one partially-filled vreg; XLA fusion is faster than a
    # pallas_call launch plus the de-interleave transposes.
    if n < _SMALL_N and not force_pallas:
        return _decode_ref(x)

    # --- tiling: big blocks (amortize ~0.35us/step), >=_MIN_STEPS grid steps,
    #     block rows a multiple of the in-kernel sub-chunk (sublane aligned). ---
    r = pl.cdiv(n, _LANES)                                  # sublane rows needed
    tr = max(_SUB, min(_TR_MAX, _round_up(pl.cdiv(r, _MIN_STEPS), _SUB)))
    r_pad = _round_up(r, tr)                                # rows after padding
    npad = r_pad * _LANES

    # --- layout plumbing: pad first so it fuses into the de-interleave copy.
    # planes[c, m] = x[m, i, j] with c = j*3 + i -> [a1x,a1y,a1z,a2x,a2y,a2z]
    xp = jnp.pad(x, ((0, npad - n), (0, 0), (0, 0)))        # (Npad, 3, 2)
    planes = jnp.transpose(xp, (2, 1, 0)).reshape(6, r_pad, _LANES)

    grid = (r_pad // tr,)
    out_planes = pl.pallas_call(
        _rot6d_kernel,
        out_shape=jax.ShapeDtypeStruct((9, r_pad, _LANES), jnp.float32),
        grid_spec=pltpu.PrefetchScalarGridSpec(
            num_scalar_prefetch=0,
            grid=grid,
            in_specs=[pl.BlockSpec((6, tr, _LANES), lambda i: (0, i, 0))],
            out_specs=pl.BlockSpec((9, tr, _LANES), lambda i: (0, i, 0)),
        ),
        compiler_params=pltpu.CompilerParams(
            dimension_semantics=("parallel",)),
        cost_estimate=pl.CostEstimate(
            flops=38 * npad,
            transcendentals=2 * npad,
            bytes_accessed=(6 + 9) * 4 * npad),
    )(planes)

    # rows ordered [b1x..b1z, b2x..b2z, b3x..b3z]; torch.stack([b1,b2,b3], -1)
    # gives out[m, i, j] = b_{j+1}[m, i] = out_planes[j*3 + i, m].
    out_planes = out_planes.reshape(9, npad)[:, :n]                 # (9, N)
    return out_planes.reshape(3, 3, n).transpose(2, 1, 0)           # (N, 3, 3)


if __name__ == "__main__":
    key = jax.random.PRNGKey(0)
    k1, k2 = jax.random.split(key)

    # Small shape consistent with the module: batch=2, seq=8 joints,
    # 6-d continuous rotation representation each -> N = 16 rotations.
    x_small = jax.random.normal(k1, (2, 8, 6), dtype=jnp.float32)
    out = continuous_rot_repr_decode(x_small, force_pallas=True)   # force pallas path
    out = jax.block_until_ready(out)

    ref = _decode_ref(jnp.asarray(x_small, jnp.float32).reshape(-1, 3, 2))
    assert out.shape == (16, 3, 3), out.shape
    assert jnp.allclose(out, ref, atol=1e-5, rtol=1e-5), float(
        jnp.max(jnp.abs(out - ref)))

    # Sanity: columns of each output matrix are orthonormal (rotation matrix).
    eye = jnp.einsum("nij,nik->njk", out, out)
    assert jnp.allclose(eye, jnp.eye(3)[None], atol=1e-4)

    # Second check: a batch large enough to exercise multi-step grid and the
    # multi-chunk inner loop (still tiny: ~54K floats).
    x_big = jax.random.normal(k2, (9000, 6), dtype=jnp.float32)
    out_b = jax.block_until_ready(
        continuous_rot_repr_decode(x_big, force_pallas=True))
    ref_b = _decode_ref(jnp.asarray(x_big, jnp.float32).reshape(-1, 3, 2))
    assert out_b.shape == (9000, 3, 3)
    assert jnp.allclose(out_b, ref_b, atol=1e-5, rtol=1e-5), float(
        jnp.max(jnp.abs(out_b - ref_b)))

    print("KERNEL_OK")
</pallas_src>

<mosaic_0001>
module attributes {stable_mosaic.version = 11 : i64} {
  func.func @_rot6d_kernel(%arg0: i32, %arg1: memref<6x16x128xf32, #tpu.memory_space<vmem>>, %arg2: memref<9x16x128xf32, #tpu.memory_space<vmem>>) attributes {dimension_semantics = [#tpu.dimension_semantics<parallel>], iteration_bounds = array<i64: 1>, scalar_prefetch = 0 : i64, scratch_operands = 0 : i64, tpu.core_type = #tpu.core_type<tc>, window_params = [{transform_indices = @transform_0, window_bounds = array<i64: 6, 16, 128>}, {transform_indices = @transform_1, window_bounds = array<i64: 9, 16, 128>}]} {
    %c0_i32 = arith.constant 0 : i32
    %c16_i32 = arith.constant 16 : i32
    %0 = arith.muli %c0_i32, %c16_i32 : i32
    %1 = tpu.assume_multiple %0, 16 : i32
    %c0 = arith.constant 0 : index
    %2 = arith.index_cast %1 : i32 to index
    %c0_0 = arith.constant 0 : index
    %3 = vector.load %arg1[%c0, %2, %c0_0] : memref<6x16x128xf32, #tpu.memory_space<vmem>>, vector<1x16x128xf32>
    %4 = vector.shape_cast %3 : vector<1x16x128xf32> to vector<16x128xf32>
    %c1 = arith.constant 1 : index
    %5 = arith.index_cast %1 : i32 to index
    %c0_1 = arith.constant 0 : index
    %6 = vector.load %arg1[%c1, %5, %c0_1] : memref<6x16x128xf32, #tpu.memory_space<vmem>>, vector<1x16x128xf32>
    %7 = vector.shape_cast %6 : vector<1x16x128xf32> to vector<16x128xf32>
    %c2 = arith.constant 2 : index
    %8 = arith.index_cast %1 : i32 to index
    %c0_2 = arith.constant 0 : index
    %9 = vector.load %arg1[%c2, %8, %c0_2] : memref<6x16x128xf32, #tpu.memory_space<vmem>>, vector<1x16x128xf32>
    %10 = vector.shape_cast %9 : vector<1x16x128xf32> to vector<16x128xf32>
    %c3 = arith.constant 3 : index
    %11 = arith.index_cast %1 : i32 to index
    %c0_3 = arith.constant 0 : index
    %12 = vector.load %arg1[%c3, %11, %c0_3] : memref<6x16x128xf32, #tpu.memory_space<vmem>>, vector<1x16x128xf32>
    %13 = vector.shape_cast %12 : vector<1x16x128xf32> to vector<16x128xf32>
    %c4 = arith.constant 4 : index
    %14 = arith.index_cast %1 : i32 to index
    %c0_4 = arith.constant 0 : index
    %15 = vector.load %arg1[%c4, %14, %c0_4] : memref<6x16x128xf32, #tpu.memory_space<vmem>>, vector<1x16x128xf32>
    %16 = vector.shape_cast %15 : vector<1x16x128xf32> to vector<16x128xf32>
    %c5 = arith.constant 5 : index
    %17 = arith.index_cast %1 : i32 to index
    %c0_5 = arith.constant 0 : index
    %18 = vector.load %arg1[%c5, %17, %c0_5] : memref<6x16x128xf32, #tpu.memory_space<vmem>>, vector<1x16x128xf32>
    %19 = vector.shape_cast %18 : vector<1x16x128xf32> to vector<16x128xf32>
    %20 = arith.mulf %4, %4 : vector<16x128xf32>
    %21 = arith.mulf %7, %7 : vector<16x128xf32>
    %22 = arith.addf %20, %21 : vector<16x128xf32>
    %23 = arith.mulf %10, %10 : vector<16x128xf32>
    %24 = arith.addf %22, %23 : vector<16x128xf32>
    %cst = arith.constant 1.000000e-24 : f32
    %25 = vector.broadcast %cst : f32 to vector<16x128xf32>
    %26 = arith.maximumf %24, %25 : vector<16x128xf32>
    %27 = math.rsqrt %26 : vector<16x128xf32>
    %28 = arith.mulf %4, %27 : vector<16x128xf32>
    %29 = arith.mulf %7, %27 : vector<16x128xf32>
    %30 = arith.mulf %10, %27 : vector<16x128xf32>
    %31 = arith.mulf %28, %13 : vector<16x128xf32>
    %32 = arith.mulf %29, %16 : vector<16x128xf32>
    %33 = arith.addf %31, %32 : vector<16x128xf32>
    %34 = arith.mulf %30, %19 : vector<16x128xf32>
    %35 = arith.addf %33, %34 : vector<16x128xf32>
    %36 = arith.mulf %35, %28 : vector<16x128xf32>
    %37 = arith.subf %13, %36 : vector<16x128xf32>
    %38 = arith.mulf %35, %29 : vector<16x128xf32>
    %39 = arith.subf %16, %38 : vector<16x128xf32>
    %40 = arith.mulf %35, %30 : vector<16x128xf32>
    %41 = arith.subf %19, %40 : vector<16x128xf32>
    %42 = arith.mulf %37, %37 : vector<16x128xf32>
    %43 = arith.mulf %39, %39 : vector<16x128xf32>
    %44 = arith.addf %42, %43 : vector<16x128xf32>
    %45 = arith.mulf %41, %41 : vector<16x128xf32>
    %46 = arith.addf %44, %45 : vector<16x128xf32>
    %cst_6 = arith.constant 1.000000e-24 : f32
    %47 = vector.broadcast %cst_6 : f32 to vector<16x128xf32>
    %48 = arith.maximumf %46, %47 : vector<16x128xf32>
    %49 = math.rsqrt %48 : vector<16x128xf32>
    %50 = arith.mulf %37, %49 : vector<16x128xf32>
    %51 = arith.mulf %39, %49 : vector<16x128xf32>
    %52 = arith.mulf %41, %49 : vector<16x128xf32>
    %53 = arith.mulf %29, %52 : vector<16x128xf32>
    %54 = arith.mulf %30, %51 : vector<16x128xf32>
    %55 = arith.subf %53, %54 : vector<16x128xf32>
    %56 = arith.mulf %30, %50 : vector<16x128xf32>
    %57 = arith.mulf %28, %52 : vector<16x128xf32>
    %58 = arith.subf %56, %57 : vector<16x128xf32>
    %59 = arith.mulf %28, %51 : vector<16x128xf32>
    %60 = arith.mulf %29, %50 : vector<16x128xf32>
    %61 = arith.subf %59, %60 : vector<16x128xf32>
    %c0_7 = arith.constant 0 : index
    %62 = arith.index_cast %1 : i32 to index
    %c0_8 = arith.constant 0 : index
    %63 = vector.load %arg2[%c0_7, %62, %c0_8] : memref<9x16x128xf32, #tpu.memory_space<vmem>>, vector<1x16x128xf32>
    %64 = vector.shape_cast %63 : vector<1x16x128xf32> to vector<16x128xf32>
    %65 = vector.shape_cast %28 : vector<16x128xf32> to vector<1x16x128xf32>
    tpu.vector_store %arg2[%c0_7, %62, %c0_8], %65 {strides = array<i32>} : memref<9x16x128xf32, #tpu.memory_space<vmem>>, vector<1x16x128xf32>,
    %c1_9 = arith.constant 1 : index
    %66 = arith.index_cast %1 : i32 to index
    %c0_10 = arith.constant 0 : index
    %67 = vector.load %arg2[%c1_9, %66, %c0_10] : memref<9x16x128xf32, #tpu.memory_space<vmem>>, vector<1x16x128xf32>
    %68 = vector.shape_cast %67 : vector<1x16x128xf32> to vector<16x128xf32>
    %69 = vector.shape_cast %29 : vector<16x128xf32> to vector<1x16x128xf32>
    tpu.vector_store %arg2[%c1_9, %66, %c0_10], %69 {strides = array<i32>} : memref<9x16x128xf32, #tpu.memory_space<vmem>>, vector<1x16x128xf32>,
    %c2_11 = arith.constant 2 : index
    %70 = arith.index_cast %1 : i32 to index
    %c0_12 = arith.constant 0 : index
    %71 = vector.load %arg2[%c2_11, %70, %c0_12] : memref<9x16x128xf32, #tpu.memory_space<vmem>>, vector<1x16x128xf32>
    %72 = vector.shape_cast %71 : vector<1x16x128xf32> to vector<16x128xf32>
    %73 = vector.shape_cast %30 : vector<16x128xf32> to vector<1x16x128xf32>
    tpu.vector_store %arg2[%c2_11, %70, %c0_12], %73 {strides = array<i32>} : memref<9x16x128xf32, #tpu.memory_space<vmem>>, vector<1x16x128xf32>,
    %c3_13 = arith.constant 3 : index
    %74 = arith.index_cast %1 : i32 to index
    %c0_14 = arith.constant 0 : index
    %75 = vector.load %arg2[%c3_13, %74, %c0_14] : memref<9x16x128xf32, #tpu.memory_space<vmem>>, vector<1x16x128xf32>
    %76 = vector.shape_cast %75 : vector<1x16x128xf32> to vector<16x128xf32>
    %77 = vector.shape_cast %50 : vector<16x128xf32> to vector<1x16x128xf32>
    tpu.vector_store %arg2[%c3_13, %74, %c0_14], %77 {strides = array<i32>} : memref<9x16x128xf32, #tpu.memory_space<vmem>>, vector<1x16x128xf32>,
    %c4_15 = arith.constant 4 : index
    %78 = arith.index_cast %1 : i32 to index
    %c0_16 = arith.constant 0 : index
    %79 = vector.load %arg2[%c4_15, %78, %c0_16] : memref<9x16x128xf32, #tpu.memory_space<vmem>>, vector<1x16x128xf32>
    %80 = vector.shape_cast %79 : vector<1x16x128xf32> to vector<16x128xf32>
    %81 = vector.shape_cast %51 : vector<16x128xf32> to vector<1x16x128xf32>
    tpu.vector_store %arg2[%c4_15, %78, %c0_16], %81 {strides = array<i32>} : memref<9x16x128xf32, #tpu.memory_space<vmem>>, vector<1x16x128xf32>,
    %c5_17 = arith.constant 5 : index
    %82 = arith.index_cast %1 : i32 to index
    %c0_18 = arith.constant 0 : index
    %83 = vector.load %arg2[%c5_17, %82, %c0_18] : memref<9x16x128xf32, #tpu.memory_space<vmem>>, vector<1x16x128xf32>
    %84 = vector.shape_cast %83 : vector<1x16x128xf32> to vector<16x128xf32>
    %85 = vector.shape_cast %52 : vector<16x128xf32> to vector<1x16x128xf32>
    tpu.vector_store %arg2[%c5_17, %82, %c0_18], %85 {strides = array<i32>} : memref<9x16x128xf32, #tpu.memory_space<vmem>>, vector<1x16x128xf32>,
    %c6 = arith.constant 6 : index
    %86 = arith.index_cast %1 : i32 to index
    %c0_19 = arith.constant 0 : index
    %87 = vector.load %arg2[%c6, %86, %c0_19] : memref<9x16x128xf32, #tpu.memory_space<vmem>>, vector<1x16x128xf32>
    %88 = vector.shape_cast %87 : vector<1x16x128xf32> to vector<16x128xf32>
    %89 = vector.shape_cast %55 : vector<16x128xf32> to vector<1x16x128xf32>
    tpu.vector_store %arg2[%c6, %86, %c0_19], %89 {strides = array<i32>} : memref<9x16x128xf32, #tpu.memory_space<vmem>>, vector<1x16x128xf32>,
    %c7 = arith.constant 7 : index
    %90 = arith.index_cast %1 : i32 to index
    %c0_20 = arith.constant 0 : index
    %91 = vector.load %arg2[%c7, %90, %c0_20] : memref<9x16x128xf32, #tpu.memory_space<vmem>>, vector<1x16x128xf32>
    %92 = vector.shape_cast %91 : vector<1x16x128xf32> to vector<16x128xf32>
    %93 = vector.shape_cast %58 : vector<16x128xf32> to vector<1x16x128xf32>
    tpu.vector_store %arg2[%c7, %90, %c0_20], %93 {strides = array<i32>} : memref<9x16x128xf32, #tpu.memory_space<vmem>>, vector<1x16x128xf32>,
    %c8 = arith.constant 8 : index
    %94 = arith.index_cast %1 : i32 to index
    %c0_21 = arith.constant 0 : index
    %95 = vector.load %arg2[%c8, %94, %c0_21] : memref<9x16x128xf32, #tpu.memory_space<vmem>>, vector<1x16x128xf32>
    %96 = vector.shape_cast %95 : vector<1x16x128xf32> to vector<16x128xf32>
    %97 = vector.shape_cast %61 : vector<16x128xf32> to vector<1x16x128xf32>
    tpu.vector_store %arg2[%c8, %94, %c0_21], %97 {strides = array<i32>} : memref<9x16x128xf32, #tpu.memory_space<vmem>>, vector<1x16x128xf32>,
    %c1_i32 = arith.constant 1 : i32
    return
  }
  func.func @transform_0(%arg0: i32) -> (i32, i32, i32) {
    %c0_i32 = arith.constant 0 : i32
    %c0_i32_0 = arith.constant 0 : i32
    %c0_i32_1 = arith.constant 0 : i32
    return %c0_i32, %arg0, %c0_i32_0 : i32, i32, i32
  }
  func.func @transform_1(%arg0: i32) -> (i32, i32, i32) {
    %c0_i32 = arith.constant 0 : i32
    %c0_i32_0 = arith.constant 0 : i32
    %c0_i32_1 = arith.constant 0 : i32
    return %c0_i32, %arg0, %c0_i32_0 : i32, i32, i32
  }
}

</mosaic_0001>

<llo_original>
// kernel: continuous_rot_repr_decode.1
$region0: #{continuous_rot_repr_decode.1}
  #allocation0 [shape = 'u32[]', space=smem, size = 0x4, offset = 0x4, fixed_abs, tag = 'smem constant byte address 0x4 - core index']
  #allocation1 [shape = 'u32[144,128]{1,0:T(1,128)}', space=vmem, size = 0x12000, scoped, tag = 'internal scratch']
  %s0 = inlined_call_operand.vmem [shape: f32[6,16,128], index: 0, kind: input, shape index: {}]
  %s1 = inlined_call_operand.vmem [shape: f32[9,16,128], index: 1, kind: output, shape index: {}]
  %s2 = sld [smem:[#allocation0]]
  $region14: #{continuous_rot_repr_decode.1} parent=0
    _
  %s4 = ssub.s32 1, %s2
  %s5 = scalar_select 0, %s4, %s2
  // Predicated region
  $region2: #{continuous_rot_repr_decode.1} parent=0 // pred_check
    _
  $region3: #{continuous_rot_repr_decode.1} parent=0 // pred_check_branch
    %7 = sbr.rel (0) target = $region5
  $region4: #{continuous_rot_repr_decode.1} parent=0 // pred_region
    _
  $region5: #{continuous_rot_repr_decode.1} parent=0 // pred_fallthru
    _
  %v8 = vld [vmem:[%s0] sm:$0xff]
  %v9 = vld [vmem:[%s0 + $0x8] sm:$0xff]
  %s10 = sadd.s32 0, 16
  %s11 = scalar_lea.vmem %s0, %s10
  %v12 = vld [vmem:[%s11] sm:$0xff]
  %v13 = vld [vmem:[%s11 + $0x8] sm:$0xff]
  %s14 = sadd.s32 0, 32
  %s15 = scalar_lea.vmem %s0, %s14
  %v16 = vld [vmem:[%s15] sm:$0xff]
  %v17 = vld [vmem:[%s15 + $0x8] sm:$0xff]
  %s18 = sadd.s32 0, 48
  %s19 = scalar_lea.vmem %s0, %s18
  %v20 = vld [vmem:[%s19] sm:$0xff]
  %v21 = vld [vmem:[%s19 + $0x8] sm:$0xff]
  %s22 = sadd.s32 0, 64
  %s23 = scalar_lea.vmem %s0, %s22
  %v24 = vld [vmem:[%s23] sm:$0xff]
  %v25 = vld [vmem:[%s23 + $0x8] sm:$0xff]
  %s26 = sadd.s32 0, 80
  %s27 = scalar_lea.vmem %s0, %s26
  %v28 = vld [vmem:[%s27] sm:$0xff]
  %v29 = vld [vmem:[%s27 + $0x8] sm:$0xff]
  %v30 = vmul.f32 %v8, %v8
  %v31 = vmul.f32 %v9, %v9
  %v32 = vmul.f32 %v12, %v12
  %v33 = vmul.f32 %v13, %v13
  %v34 = vadd.f32 %v30, %v32
  %v35 = vadd.f32 %v31, %v33
  %v36 = vmul.f32 %v16, %v16
  %v37 = vmul.f32 %v17, %v17
  %v38 = vadd.f32 %v34, %v36
  %v39 = vadd.f32 %v35, %v37
  %v40 = vmax.f32 %v38, 1e-24
  %v41 = vmax.f32 %v39, 1e-24
  %v42 = vrsqrt.pop %v40
  %v43 = vrsqrt.pop %v41
  %v44 = vmul.f32 %v8, %v42
  %v45 = vmul.f32 %v9, %v43
  %v46 = vmul.f32 %v12, %v42
  %v47 = vmul.f32 %v13, %v43
  %v48 = vmul.f32 %v16, %v42
  %v49 = vmul.f32 %v17, %v43
  %v50 = vmul.f32 %v44, %v20
  %v51 = vmul.f32 %v45, %v21
  %v52 = vmul.f32 %v46, %v24
  %v53 = vmul.f32 %v47, %v25
  %v54 = vadd.f32 %v50, %v52
  %v55 = vadd.f32 %v51, %v53
  %v56 = vmul.f32 %v48, %v28
  %v57 = vmul.f32 %v49, %v29
  %v58 = vadd.f32 %v54, %v56
  %v59 = vadd.f32 %v55, %v57
  %v60 = vmul.f32 %v58, %v44
  %v61 = vmul.f32 %v59, %v45
  %v62 = vsub.f32 %v20, %v60
  %v63 = vsub.f32 %v21, %v61
  %v64 = vmul.f32 %v58, %v46
  %v65 = vmul.f32 %v59, %v47
  %v66 = vsub.f32 %v24, %v64
  %v67 = vsub.f32 %v25, %v65
  %v68 = vmul.f32 %v58, %v48
  %v69 = vmul.f32 %v59, %v49
  %v70 = vsub.f32 %v28, %v68
  %v71 = vsub.f32 %v29, %v69
  %v72 = vmul.f32 %v62, %v62
  %v73 = vmul.f32 %v63, %v63
  %v74 = vmul.f32 %v66, %v66
  %v75 = vmul.f32 %v67, %v67
  %v76 = vadd.f32 %v72, %v74
  %v77 = vadd.f32 %v73, %v75
  %v78 = vmul.f32 %v70, %v70
  %v79 = vmul.f32 %v71, %v71
  %v80 = vadd.f32 %v76, %v78
  %v81 = vadd.f32 %v77, %v79
  %v82 = vmax.f32 %v80, 1e-24
  %v83 = vmax.f32 %v81, 1e-24
  %v84 = vrsqrt.pop %v82
  %v85 = vrsqrt.pop %v83
  %v86 = vmul.f32 %v62, %v84
  %v87 = vmul.f32 %v63, %v85
  %v88 = vmul.f32 %v66, %v84
  %v89 = vmul.f32 %v67, %v85
  %v90 = vmul.f32 %v70, %v84
  %v91 = vmul.f32 %v71, %v85
  %v92 = vmul.f32 %v46, %v90
  %v93 = vmul.f32 %v47, %v91
  %v94 = vmul.f32 %v48, %v88
  %v95 = vmul.f32 %v49, %v89
  %v96 = vsub.f32 %v92, %v94
  %v97 = vsub.f32 %v93, %v95
  %v98 = vmul.f32 %v48, %v86
  %v99 = vmul.f32 %v49, %v87
  %v100 = vmul.f32 %v44, %v90
  %v101 = vmul.f32 %v45, %v91
  %v102 = vsub.f32 %v98, %v100
  %v103 = vsub.f32 %v99, %v101
  %v104 = vmul.f32 %v44, %v88
  %v105 = vmul.f32 %v45, %v89
  %v106 = vmul.f32 %v46, %v86
  %v107 = vmul.f32 %v47, %v87
  %v108 = vsub.f32 %v104, %v106
  %v109 = vsub.f32 %v105, %v107
  %110 = vst [vmem:[%s1] sm:$0xff] %v44
  %111 = vst [vmem:[%s1 + $0x8] sm:$0xff] %v45
  %s112 = scalar_lea.vmem %s1, %s10
  %113 = vst [vmem:[%s112] sm:$0xff] %v46
  %114 = vst [vmem:[%s112 + $0x8] sm:$0xff] %v47
  %s115 = scalar_lea.vmem %s1, %s14
  %116 = vst [vmem:[%s115] sm:$0xff] %v48
  %117 = vst [vmem:[%s115 + $0x8] sm:$0xff] %v49
  %s118 = scalar_lea.vmem %s1, %s18
  %119 = vst [vmem:[%s118] sm:$0xff] %v86
  %120 = vst [vmem:[%s118 + $0x8] sm:$0xff] %v87
  %s121 = scalar_lea.vmem %s1, %s22
  %122 = vst [vmem:[%s121] sm:$0xff] %v88
  %123 = vst [vmem:[%s121 + $0x8] sm:$0xff] %v89
  %s124 = scalar_lea.vmem %s1, %s26
  %125 = vst [vmem:[%s124] sm:$0xff] %v90
  %126 = vst [vmem:[%s124 + $0x8] sm:$0xff] %v91
  %s127 = sadd.s32 0, 96
  %s128 = scalar_lea.vmem %s1, %s127
  %129 = vst [vmem:[%s128] sm:$0xff] %v96
  %130 = vst [vmem:[%s128 + $0x8] sm:$0xff] %v97
  %s131 = sadd.s32 0, 112
  %s132 = scalar_lea.vmem %s1, %s131
  %133 = vst [vmem:[%s132] sm:$0xff] %v102
  %134 = vst [vmem:[%s132 + $0x8] sm:$0xff] %v103
  %s135 = sadd.s32 0, 128
  %s136 = scalar_lea.vmem %s1, %s135
  %137 = vst [vmem:[%s136] sm:$0xff] %v108
  %138 = vst [vmem:[%s136 + $0x8] sm:$0xff] %v109
  // Predicated region
  $region6: #{continuous_rot_repr_decode.1} parent=0 // pred_check
    _
  $region7: #{continuous_rot_repr_decode.1} parent=0 // pred_check_branch
    %140 = sbr.rel (0) target = $region9
  $region8: #{continuous_rot_repr_decode.1} parent=0 // pred_region
    _
  $region9: #{continuous_rot_repr_decode.1} parent=0 // pred_fallthru
    _
  // Predicated region
  $region10: #{continuous_rot_repr_decode.1} parent=0 // pred_check
    _
  $region11: #{continuous_rot_repr_decode.1} parent=0 // pred_check_branch
    %142 = sbr.rel (0) target = $region13
  $region12: #{continuous_rot_repr_decode.1} parent=0 // pred_region
    _
  $region13: #{continuous_rot_repr_decode.1} parent=0 // pred_fallthru
    _

</llo_original>
